<compile_context>
chip_gen: v5e
topology: v5e:2x2
jax: 0.10.0
libtpu: 0.0.40
codegen_flags: <defaults>
</compile_context>

<pallas_src>
import functools

import jax
import jax.numpy as jnp
from jax import lax
from jax.experimental import pallas as pl
from jax.experimental.pallas import tpu as pltpu

FEATURE_NUM = 312  # D (true feature width of the head)
LN_EPS = 1e-5

# Rows per grid step. At S=8, Dp=384 this is ~3 MiB per double-buffered hidden
# tile -> comfortably inside the scoped-VMEM default on v5e (16 MiB), v6e
# (32 MiB) and v7x (32 MiB of 64 MiB physical).
_TB_MAX = 256


def _pool_ln_kernel(h_ref, p_ref, b_ref, o_ref, *, d_true):
    # h_ref: (TB, S, Dp)  batch tile of hidden states (Dp = D padded to 128)
    # p_ref: (3, Dp)      row 0 = W (Linear(D,1) weight), row 1 = gamma, row 2 = beta
    # b_ref: (1,) SMEM    Linear(D,1) bias (scalar)
    # o_ref: (TB, Dp)     LayerNorm(pooled) output (padded lanes written as 0)
    h = h_ref[...]                         # (TB, S, Dp) f32
    w = p_ref[0:1, :]                      # (1, Dp)  padded lanes are 0
    gamma = p_ref[1:2, :]                  # (1, Dp)
    beta = p_ref[2:3, :]                   # (1, Dp)
    bias = b_ref[0]                        # scalar

    # Linear(D -> 1) logits as a lane reduce (keeps the MXU out of a degenerate
    # N=1 matmul). Padded lanes of h and w are zero, so they contribute nothing.
    logits = jnp.sum(h * w[None, :, :], axis=-1) + bias          # (TB, S)

    # Softmax over the sequence axis (last axis -> lanes).
    m = jnp.max(logits, axis=-1, keepdims=True)                  # (TB, 1)
    e = jnp.exp(logits - m)                                      # (TB, S)
    denom = jnp.sum(e, axis=-1, keepdims=True)                   # (TB, 1)
    attn = e * pl.reciprocal(denom, approx=True)                 # (TB, S)

    # Weighted sum over the (small) sequence axis -> pooled features.
    pooled = jnp.sum(h * attn[:, :, None], axis=1)               # (TB, Dp)

    # LayerNorm over the true D features (biased variance, eps=1e-5).
    # Padded lanes of `pooled` are zero; mask them out of the centered values
    # so they do not pollute the variance.
    inv_d = 1.0 / float(d_true)
    col = lax.broadcasted_iota(jnp.int32, pooled.shape, 1)       # (TB, Dp)
    valid = col < d_true
    mean = jnp.sum(pooled, axis=-1, keepdims=True) * inv_d       # (TB, 1)
    centered = jnp.where(valid, pooled - mean, 0.0)              # (TB, Dp)
    var = jnp.sum(centered * centered, axis=-1, keepdims=True) * inv_d
    normed = centered * lax.rsqrt(var + LN_EPS)
    o_ref[...] = normed * gamma + beta                           # padded lanes -> 0


def bert_extractor_head(hidden_states, w, b, gamma, beta):
    """hidden_states: [B, S, D] float; returns [B, D] float32."""
    B, S, D = hidden_states.shape
    Dp = ((D + 127) // 128) * 128          # lane-dense feature width (312 -> 384)

    # Batch tile: whole batch in one grid step when it fits, otherwise tiles of
    # _TB_MAX rows (multiple of 8 for sublane alignment).
    if B <= _TB_MAX:
        TB, Bp = B, B
    else:
        TB = _TB_MAX
        Bp = pl.cdiv(B, TB) * TB

    h = hidden_states.astype(jnp.float32)
    h = jnp.pad(h, ((0, Bp - B), (0, 0), (0, Dp - D)))           # zero-pad B, D

    # Consolidate the three replicated (D,) params into one (3, Dp) VMEM input.
    params = jnp.zeros((3, Dp), jnp.float32)
    params = params.at[0, :D].set(w.reshape(-1).astype(jnp.float32))
    params = params.at[1, :D].set(gamma.reshape(-1).astype(jnp.float32))
    params = params.at[2, :D].set(beta.reshape(-1).astype(jnp.float32))

    b_smem = b.reshape(1).astype(jnp.float32)

    grid = (Bp // TB,)
    kernel = functools.partial(_pool_ln_kernel, d_true=D)

    out = pl.pallas_call(
        kernel,
        out_shape=jax.ShapeDtypeStruct((Bp, Dp), jnp.float32),
        grid_spec=pltpu.PrefetchScalarGridSpec(
            num_scalar_prefetch=0,
            grid=grid,
            in_specs=[
                pl.BlockSpec((TB, S, Dp), lambda i: (i, 0, 0)),   # hidden tile
                pl.BlockSpec((3, Dp), lambda i: (0, 0)),          # [W; gamma; beta]
                pl.BlockSpec(memory_space=pltpu.MemorySpace.SMEM),  # bias scalar
            ],
            out_specs=pl.BlockSpec((TB, Dp), lambda i: (i, 0)),
        ),
        compiler_params=pltpu.CompilerParams(
            # Only shard across TensorCores when there is >1 step of real work.
            dimension_semantics=("parallel",) if grid[0] > 1 else ("arbitrary",),
        ),
    )(h, params, b_smem)

    return out[:B, :D]


if __name__ == "__main__":
    key = jax.random.PRNGKey(0)
    k_h, k_w, k_b = jax.random.split(key, 3)

    B, S, D = 2, 8, FEATURE_NUM  # batch=2, seq=8 (max_length), feature=312

    # Synthetic "last_hidden_state" standing in for the BERT encoder output.
    hidden_states = jax.random.normal(k_h, (B, S, D), dtype=jnp.float32)

    # Deterministic parameter init (shapes from the module __init__).
    bound = 1.0 / (D ** 0.5)
    w = jax.random.uniform(k_w, (D,), minval=-bound, maxval=bound,
                           dtype=jnp.float32)           # Linear(D, 1).weight
    b = jax.random.uniform(k_b, (1,), minval=-bound, maxval=bound,
                           dtype=jnp.float32)           # Linear(D, 1).bias
    gamma = jnp.ones((D,), dtype=jnp.float32)           # LayerNorm.weight
    beta = jnp.zeros((D,), dtype=jnp.float32)           # LayerNorm.bias

    out = bert_extractor_head(hidden_states, w, b, gamma, beta)
    out = jax.block_until_ready(out)

    # Pure-JAX reference check of the head.
    logits = hidden_states @ w + b[0]                   # [B, S]
    attn = jax.nn.softmax(logits, axis=-1)[..., None]   # [B, S, 1]
    pooled = jnp.sum(hidden_states * attn, axis=1)      # [B, D]
    mu = pooled.mean(-1, keepdims=True)
    var = ((pooled - mu) ** 2).mean(-1, keepdims=True)
    ref = (pooled - mu) / jnp.sqrt(var + LN_EPS) * gamma + beta
    assert out.shape == (B, D)
    assert jnp.allclose(out, ref, atol=1e-4, rtol=1e-4)

    print("KERNEL_OK")
</pallas_src>

<mosaic_0001>
module attributes {stable_mosaic.version = 11 : i64} {
  func.func @_pool_ln_kernel(%arg0: i32, %arg1: memref<2x8x384xf32, #tpu.memory_space<vmem>>, %arg2: memref<3x384xf32, #tpu.memory_space<vmem>>, %arg3: memref<1xf32, #tpu.memory_space<smem>>, %arg4: memref<2x384xf32, #tpu.memory_space<vmem>>) attributes {dimension_semantics = [#tpu.dimension_semantics<arbitrary>], iteration_bounds = array<i64: 1>, scalar_prefetch = 0 : i64, scratch_operands = 0 : i64, tpu.core_type = #tpu.core_type<tc>, window_params = [{transform_indices = @transform_0, window_bounds = array<i64: 2, 8, 384>}, {pipeline_mode = #tpu.pipeline_mode<synchronous>, transform_indices = @transform_1, window_bounds = array<i64: 3, 384>}, {transform_indices = @transform_2, window_bounds = array<i64: 1>}, {transform_indices = @transform_3, window_bounds = array<i64: 2, 384>}]} {
    %c0 = arith.constant 0 : index
    %c0_0 = arith.constant 0 : index
    %c0_1 = arith.constant 0 : index
    %0 = vector.load %arg1[%c0, %c0_0, %c0_1] : memref<2x8x384xf32, #tpu.memory_space<vmem>>, vector<2x8x384xf32>
    %c0_2 = arith.constant 0 : index
    %c0_3 = arith.constant 0 : index
    %1 = vector.load %arg2[%c0_2, %c0_3] : memref<3x384xf32, #tpu.memory_space<vmem>>, vector<1x384xf32>
    %c1 = arith.constant 1 : index
    %c0_4 = arith.constant 0 : index
    %2 = vector.load %arg2[%c1, %c0_4] : memref<3x384xf32, #tpu.memory_space<vmem>>, vector<1x384xf32>
    %c2 = arith.constant 2 : index
    %c0_5 = arith.constant 0 : index
    %3 = vector.load %arg2[%c2, %c0_5] : memref<3x384xf32, #tpu.memory_space<vmem>>, vector<1x384xf32>
    %c0_6 = arith.constant 0 : index
    %4 = memref.load %arg3[%c0_6] : memref<1xf32, #tpu.memory_space<smem>>
    %5 = vector.shape_cast %1 : vector<1x384xf32> to vector<1x1x384xf32>
    %6 = vector.broadcast %5 : vector<1x1x384xf32> to vector<2x8x384xf32>
    %7 = arith.mulf %0, %6 : vector<2x8x384xf32>
    %cst = arith.constant dense<0.000000e+00> : vector<2x8xf32>
    %8 = vector.multi_reduction <add>, %7, %cst [2] : vector<2x8x384xf32> to vector<2x8xf32>
    %9 = vector.broadcast %4 : f32 to vector<2x8xf32>
    %10 = arith.addf %8, %9 : vector<2x8xf32>
    %cst_7 = arith.constant dense<0xFF800000> : vector<2xf32>
    %11 = vector.multi_reduction <maximumf>, %10, %cst_7 [1] : vector<2x8xf32> to vector<2xf32>
    %12 = vector.shape_cast %11 : vector<2xf32> to vector<2x1xf32>
    %13 = vector.broadcast %12 : vector<2x1xf32> to vector<2x8xf32>
    %14 = arith.subf %10, %13 : vector<2x8xf32>
    %15 = math.exp %14 : vector<2x8xf32>
    %cst_8 = arith.constant dense<0.000000e+00> : vector<2xf32>
    %16 = vector.multi_reduction <add>, %15, %cst_8 [1] : vector<2x8xf32> to vector<2xf32>
    %17 = vector.shape_cast %16 : vector<2xf32> to vector<2x1xf32>
    %18 = tpu.reciprocal %17 {approx = true} : vector<2x1xf32> -> vector<2x1xf32>
    %19 = vector.broadcast %18 : vector<2x1xf32> to vector<2x8xf32>
    %20 = arith.mulf %15, %19 : vector<2x8xf32>
    %21 = vector.shape_cast %20 : vector<2x8xf32> to vector<2x8x1xf32>
    %22 = vector.broadcast %21 : vector<2x8x1xf32> to vector<2x8x384xf32>
    %23 = arith.mulf %0, %22 : vector<2x8x384xf32>
    %cst_9 = arith.constant dense<0.000000e+00> : vector<2x384xf32>
    %24 = vector.multi_reduction <add>, %23, %cst_9 [1] : vector<2x8x384xf32> to vector<2x384xf32>
    %25 = tpu.iota {dimensions = array<i32: 1>} : vector<2x384xi32>
    %c312_i32 = arith.constant 312 : i32
    %26 = vector.broadcast %c312_i32 : i32 to vector<2x384xi32>
    %27 = arith.cmpi slt, %25, %26 : vector<2x384xi32>
    %cst_10 = arith.constant dense<0.000000e+00> : vector<2xf32>
    %28 = vector.multi_reduction <add>, %24, %cst_10 [1] : vector<2x384xf32> to vector<2xf32>
    %29 = vector.shape_cast %28 : vector<2xf32> to vector<2x1xf32>
    %cst_11 = arith.constant 0.00320512825 : f32
    %30 = vector.broadcast %cst_11 : f32 to vector<2x1xf32>
    %31 = arith.mulf %29, %30 : vector<2x1xf32>
    %32 = vector.broadcast %31 : vector<2x1xf32> to vector<2x384xf32>
    %33 = arith.subf %24, %32 : vector<2x384xf32>
    %cst_12 = arith.constant 0.000000e+00 : f32
    %34 = vector.broadcast %cst_12 : f32 to vector<2x384xf32>
    %35 = arith.select %27, %33, %34 : vector<2x384xi1>, vector<2x384xf32>
    %36 = arith.mulf %35, %35 : vector<2x384xf32>
    %cst_13 = arith.constant dense<0.000000e+00> : vector<2xf32>
    %37 = vector.multi_reduction <add>, %36, %cst_13 [1] : vector<2x384xf32> to vector<2xf32>
    %38 = vector.shape_cast %37 : vector<2xf32> to vector<2x1xf32>
    %cst_14 = arith.constant 0.00320512825 : f32
    %39 = vector.broadcast %cst_14 : f32 to vector<2x1xf32>
    %40 = arith.mulf %38, %39 : vector<2x1xf32>
    %cst_15 = arith.constant 9.99999974E-6 : f32
    %41 = vector.broadcast %cst_15 : f32 to vector<2x1xf32>
    %42 = arith.addf %40, %41 : vector<2x1xf32>
    %43 = math.rsqrt %42 : vector<2x1xf32>
    %44 = vector.broadcast %43 : vector<2x1xf32> to vector<2x384xf32>
    %45 = arith.mulf %35, %44 : vector<2x384xf32>
    %46 = vector.broadcast %2 : vector<1x384xf32> to vector<2x384xf32>
    %47 = arith.mulf %45, %46 : vector<2x384xf32>
    %48 = vector.broadcast %3 : vector<1x384xf32> to vector<2x384xf32>
    %49 = arith.addf %47, %48 : vector<2x384xf32>
    %c0_16 = arith.constant 0 : index
    %c0_17 = arith.constant 0 : index
    %50 = vector.load %arg4[%c0_16, %c0_17] : memref<2x384xf32, #tpu.memory_space<vmem>>, vector<2x384xf32>
    tpu.vector_store %arg4[%c0_16, %c0_17], %49 {strides = array<i32>} : memref<2x384xf32, #tpu.memory_space<vmem>>, vector<2x384xf32>,
    return
  }
  func.func @transform_0(%arg0: i32) -> (i32, i32, i32) {
    %c0_i32 = arith.constant 0 : i32
    %c0_i32_0 = arith.constant 0 : i32
    %c0_i32_1 = arith.constant 0 : i32
    return %arg0, %c0_i32, %c0_i32_0 : i32, i32, i32
  }
  func.func @transform_1(%arg0: i32) -> (i32, i32) {
    %c0_i32 = arith.constant 0 : i32
    %c0_i32_0 = arith.constant 0 : i32
    %c0_i32_1 = arith.constant 0 : i32
    return %c0_i32, %c0_i32_0 : i32, i32
  }
  func.func @transform_2(%arg0: i32) -> i32 {
    %c0_i32 = arith.constant 0 : i32
    %c0_i32_0 = arith.constant 0 : i32
    return %c0_i32 : i32
  }
  func.func @transform_3(%arg0: i32) -> (i32, i32) {
    %c0_i32 = arith.constant 0 : i32
    %c0_i32_0 = arith.constant 0 : i32
    return %arg0, %c0_i32 : i32, i32
  }
}

</mosaic_0001>

<llo_original>
// kernel: tpu_custom_call.1
$region0: #{tpu_custom_call.1}
  #allocation0 [shape = 'u32[]', space=smem, size = 0x4, offset = 0x4, fixed_abs, tag = 'smem constant byte address 0x4 - core index']
  #allocation1 [shape = 'u32[72,128]{1,0:T(1,128)}', space=vmem, size = 0x9000, scoped, tag = 'internal scratch']
  #allocation2 [shape = 'f32[1]{0:T(128)S(6)}', space=smem, size = 0x200, scoped, tag = 'scoped memory for tpu_custom_call.1']
  %s0 = inlined_call_operand.hbm [shape: f32[2,8,384], index: 0, kind: input, shape index: {}]
  %s1 = inlined_call_operand.hbm [shape: f32[3,384], index: 1, kind: input, shape index: {}]
  %s2 = inlined_call_operand.<no memory space> [shape: f32[1], index: 2, kind: input, shape index: {}]
  %s3 = inlined_call_operand.hbm [shape: f32[2,384], index: 3, kind: output, shape index: {}]
  %s4 = sld [smem:[#allocation0]]
  $region30: #{tpu_custom_call.1} parent=0
    _
  %s6 = ssub.s32 1, %s4
  %s7 = scalar_select 0, %s6, %s4
  %8 = sst [smem:[#allocation2]] %s2
  $region1: #{tpu_custom_call.1} parent=0
    #allocation3 [shape = 'u8[24576]{0}', space=vmem, size = 0x6000, scoped, tag = 'input window, operand 0, single buffered']
    #allocation4 [shape = 's32[1]{0}', space=sflag, size = 0x4, scoped, tag = 'scoped memory for tpu_custom_call.1']
    #allocation5 [shape = 's32[1]{0}', space=sflag, size = 0x4, scoped, tag = 'scoped memory for tpu_custom_call.1']
    #allocation6 [shape = 'u8[6144]{0}', space=vmem, size = 0x1800, scoped, tag = 'input window, operand 1, single buffered']
    #allocation7 [shape = 's32[1]{0}', space=sflag, size = 0x4, scoped, tag = 'scoped memory for tpu_custom_call.1']
    #allocation8 [shape = 'u8[3072]{0}', space=vmem, size = 0xc00, scoped, tag = 'output window, operand 0, single buffered']
    %9 = vsyncpa [#allocation4], 0
    %10 = vsyncpa [#allocation7], 0
    %11 = vsyncpa [#allocation5], 0
    // Predicated region
    $region2: #{tpu_custom_call.1} parent=1 // pred_check
      _
    $region3: #{tpu_custom_call.1} parent=1 // pred_check_branch
      %13 = sbr.rel (0) target = $region5
    $region4: #{tpu_custom_call.1} parent=1 // pred_region
      %15 = vsyncadd [#allocation4], 0
      %s16 = sshll.u32 %s0, 4
      %s17 = int_to_ptr.hbm [resolvable:$true] %s16
      %s18 = sshll.u32 [#allocation3], 4
      %s19 = int_to_ptr.vmem [resolvable:$true] %s18
      %24 = dma.hbm_to_vmem [thread:$0]  %s17, 768, %s19, [#allocation4], 384, 384, 24
    $region5: #{tpu_custom_call.1} parent=1 // pred_fallthru
      _
    // Predicated region
    $region6: #{tpu_custom_call.1} parent=1 // pred_check
      _
    $region7: #{tpu_custom_call.1} parent=1 // pred_check_branch
      %26 = sbr.rel (0) target = $region9
    $region8: #{tpu_custom_call.1} parent=1 // pred_region
      %28 = vsyncadd [#allocation7], 0
      %s30 = sshll.u32 %s1, 4
      %s31 = int_to_ptr.hbm [resolvable:$true] %s30
      %s32 = sshll.u32 [#allocation6], 4
      %s33 = int_to_ptr.vmem [resolvable:$true] %s32
      %35 = dma.hbm_to_vmem [thread:$0]  %s31, 192, %s33, [#allocation7]
    $region9: #{tpu_custom_call.1} parent=1 // pred_fallthru
      _
    // Predicated region
    $region10: #{tpu_custom_call.1} parent=1 // pred_check
      _
    $region11: #{tpu_custom_call.1} parent=1 // pred_check_branch
      %37 = sbr.rel (0) target = $region13
    $region12: #{tpu_custom_call.1} parent=1 // pred_region
      _
    $region13: #{tpu_custom_call.1} parent=1 // pred_fallthru
      _
    // Predicated region
    $region14: #{tpu_custom_call.1} parent=1 // pred_check
      _
    $region15: #{tpu_custom_call.1} parent=1 // pred_check_branch
      %39 = sbr.rel (0) target = $region17
    $region16: #{tpu_custom_call.1} parent=1 // pred_region
      %41 = dma.done [#allocation4], 768
    $region17: #{tpu_custom_call.1} parent=1 // pred_fallthru
      _
    // Predicated region
    $region18: #{tpu_custom_call.1} parent=1 // pred_check
      _
    $region19: #{tpu_custom_call.1} parent=1 // pred_check_branch
      %43 = sbr.rel (0) target = $region21
    $region20: #{tpu_custom_call.1} parent=1 // pred_region
      %45 = dma.done [#allocation7], 192
    $region21: #{tpu_custom_call.1} parent=1 // pred_fallthru
      _
    %v46 = vld [vmem:[#allocation3] sm:$0xff]
    %v47 = vld [vmem:[#allocation3 + $0x8] sm:$0xff]
    %v48 = vld [vmem:[#allocation3 + $0x10] sm:$0xff]
    %v49 = vld [vmem:[#allocation3 + $0x18] sm:$0xff]
    %v50 = vld [vmem:[#allocation3 + $0x20] sm:$0xff]
    %v51 = vld [vmem:[#allocation3 + $0x28] sm:$0xff]
    %v52 = vld [vmem:[#allocation6] ss:$4 sm:$0x7]
    %s53 = scalar_lea.vmem [#allocation6], 1
    %v54 = vld [vmem:[%s53] ss:$4 sm:$0x7]
    %s55 = scalar_lea.vmem [#allocation6], 2
    %v56 = vld [vmem:[%s55] ss:$4 sm:$0x7]
    %s57 = sld [smem:[#allocation2]]
    %v59 = vperm.slane %v52, 0
    %v60 = vperm.slane %v52, 1
    %v61 = vperm.slane %v52, 2
    %v65 = vmul.f32 %v46, %v59
    %v66 = vmul.f32 %v47, %v60
    %v67 = vmul.f32 %v48, %v61
    %v68 = vmul.f32 %v49, %v59
    %v69 = vmul.f32 %v50, %v60
    %v70 = vmul.f32 %v51, %v61
    %v71 = vadd.f32 %v65, %v66
    %v72 = vadd.f32 %v71, %v67
    %73 = vadd.xlane.f32.xlu0 %v72
    %v74 = vpop.xlane.xlu0 %73
    %v75 = vadd.f32 %v68, %v69
    %v76 = vadd.f32 %v75, %v70
    %77 = vadd.xlane.f32.xlu0 %v76
    %v78 = vpop.xlane.xlu0 %77
    %v79 = vstv %s57
    %v80 = vadd.f32 %v74, %v79
    %v81 = vadd.f32 %v78, %v79
    %v84 = vlaneseq
    %v85 = vand.u32 %v84, 127
    %v86 = vperm.slane %v80, %v85
    %v87 = vperm.slane %v81, %v85
    %vm88 = vcmask 1041409
    %v89 = vsel %vm88, %v87, %v86
    %vm91 = vcmask 58368
    %v92 = vsel %vm91, %v89, -inf
    %93 = vmax.xlane.f32.xlu0 %v92
    %v94 = vpop.xlane.xlu0 %93
    %v96 = vperm.slane %v94, 0
    %v97 = vperm.slane %v94, 1
    %v100 = vsub.f32 %v80, %v96
    %v101 = vsub.f32 %v81, %v97
    %v102 = vmul.f32 %v100, 1.442695
    %v103 = vpow.pop %v102
    %v104 = vmul.f32 %v101, 1.442695
    %v105 = vpow.pop %v104
    %108 = vset.pattern.permute.xlu0 0
    %109 = vperm.xlu0 %108, %v103
    %v110 = vpop.permute.xlu0 %109
    %111 = vset.pattern.permute.xlu0 0
    %112 = vperm.xlu0 %111, %v105
    %v113 = vpop.permute.xlu0 %112
    %v114 = vperm.slane %v110, %v85
    %v115 = vperm.slane %v113, %v85
    %v116 = vsel %vm88, %v115, %v114
    %v118 = vsel %vm91, %v116, 0.0
    %119 = vadd.xlane.f32.xlu0 %v118
    %v120 = vpop.xlane.xlu0 %119
    %v121 = vrcp.pop %v120
    %v123 = vperm.slane %v121, 0
    %v124 = vperm.slane %v121, 1
    %v127 = vmul.f32 %v103, %v123
    %v128 = vmul.f32 %v105, %v124
    %130 = vset.pattern.permute.xlu0 0
    %131 = vperm.xlu0 %130, %v127
    %v132 = vpop.permute.xlu0 %131
    %135 = vset.pattern.permute.xlu0 0
    %136 = vperm.xlu0 %135, %v128
    %v137 = vpop.permute.xlu0 %136
    %v139 = vmul.f32 %v46, %v132
    %v140 = vmul.f32 %v47, %v132
    %v141 = vmul.f32 %v48, %v132
    %v142 = vmul.f32 %v49, %v137
    %v143 = vmul.f32 %v50, %v137
    %v144 = vmul.f32 %v51, %v137
    %v145 = vrot.slane %v139, 4
    %v146 = vadd.f32 %v139, %v145
    %v147 = vrot.slane %v146, 2
    %v148 = vadd.f32 %v146, %v147
    %v149 = vrot.slane %v148, 1
    %v150 = vadd.f32 %v148, %v149
    %v151 = vrot.slane %v140, 4
    %v152 = vadd.f32 %v140, %v151
    %v153 = vrot.slane %v152, 2
    %v154 = vadd.f32 %v152, %v153
    %v155 = vrot.slane %v154, 1
    %v156 = vadd.f32 %v154, %v155
    %v157 = vrot.slane %v141, 4
    %v158 = vadd.f32 %v141, %v157
    %v159 = vrot.slane %v158, 2
    %v160 = vadd.f32 %v158, %v159
    %v161 = vrot.slane %v160, 1
    %v162 = vadd.f32 %v160, %v161
    %v163 = vrot.slane %v142, 4
    %v164 = vadd.f32 %v142, %v163
    %v165 = vrot.slane %v164, 2
    %v166 = vadd.f32 %v164, %v165
    %v167 = vrot.slane %v166, 1
    %v168 = vadd.f32 %v166, %v167
    %v169 = vrot.slane %v143, 4
    %v170 = vadd.f32 %v143, %v169
    %v171 = vrot.slane %v170, 2
    %v172 = vadd.f32 %v170, %v171
    %v173 = vrot.slane %v172, 1
    %v174 = vadd.f32 %v172, %v173
    %v175 = vrot.slane %v144, 4
    %v176 = vadd.f32 %v144, %v175
    %v177 = vrot.slane %v176, 2
    %v178 = vadd.f32 %v176, %v177
    %v179 = vrot.slane %v178, 1
    %v180 = vadd.f32 %v178, %v179
    %v181 = vadd.s32 %v85, 128
    %v182 = vadd.s32 %v85, 256
    %vm183 = vcmp.lt.s32.totalorder %v85, 312
    %vm184 = vcmp.lt.s32.totalorder %v181, 312
    %vm185 = vcmp.lt.s32.totalorder %v182, 312
    %v192 = vsel %vm88, %v168, %v150
    %v193 = vsel %vm88, %v174, %v156
    %v194 = vsel %vm88, %v180, %v162
    %vm198 = vcmask 1041408
    %v199 = vsel %vm198, %v192, 0.0
    %v200 = vsel %vm198, %v193, 0.0
    %v201 = vadd.f32 %v199, %v200
    %v202 = vsel %vm198, %v194, 0.0
    %v203 = vadd.f32 %v201, %v202
    %204 = vadd.xlane.f32.xlu0 %v203
    %v205 = vpop.xlane.xlu0 %204
    %v206 = vmul.f32 %v205, 0.0032051282
    %v208 = vrot.slane %v206, 1
    %v211 = vsub.f32 %v150, %v206
    %v212 = vsub.f32 %v156, %v206
    %v213 = vsub.f32 %v162, %v206
    %v214 = vsub.f32 %v168, %v208
    %v215 = vsub.f32 %v174, %v208
    %v216 = vsub.f32 %v180, %v208
    %v223 = vrot.slane %v214, 7
    %v224 = vsel %vm88, %v223, %v211
    %v225 = vrot.slane %v215, 7
    %v226 = vsel %vm88, %v225, %v212
    %v227 = vrot.slane %v216, 7
    %v228 = vsel %vm88, %v227, %v213
    %v232 = vsel %vm183, %v224, 0.0
    %v233 = vsel %vm184, %v226, 0.0
    %v234 = vsel %vm185, %v228, 0.0
    %v235 = vmul.f32 %v232, %v232
    %v236 = vmul.f32 %v233, %v233
    %v237 = vmul.f32 %v234, %v234
    %v238 = vsel %vm198, %v235, 0.0
    %v239 = vsel %vm198, %v236, 0.0
    %v240 = vadd.f32 %v238, %v239
    %v241 = vsel %vm198, %v237, 0.0
    %v242 = vadd.f32 %v240, %v241
    %243 = vadd.xlane.f32.xlu0 %v242
    %v244 = vpop.xlane.xlu0 %243
    %v245 = vmul.f32 %v244, 0.0032051282
    %v246 = vadd.f32 %v245, 1e-05
    %v247 = vrsqrt.pop %v246
    %v248 = vmul.f32 %v247, %v246
    %v249 = vmul.f32 %v248, %v247
    %v250 = vmul.f32 0.5, %v249
    %v251 = vsub.f32 1.5, %v250
    %v252 = vmul.f32 %v247, %v251
    %vm253 = vweird.f32 %v246
    %vm254 = vweird.f32 %v247
    %vm255 = vmor %vm253, %vm254
    %v256 = vsel %vm255, %v247, %v252
    %v257 = vmul.f32 %v232, %v256
    %v258 = vmul.f32 %v233, %v256
    %v259 = vmul.f32 %v234, %v256
    %v261 = vperm.slane %v54, 0
    %v262 = vperm.slane %v54, 1
    %v263 = vperm.slane %v54, 2
    %v267 = vmul.f32 %v257, %v261
    %v268 = vmul.f32 %v258, %v262
    %v269 = vmul.f32 %v259, %v263
    %v271 = vperm.slane %v56, 0
    %v272 = vperm.slane %v56, 1
    %v273 = vperm.slane %v56, 2
    %v277 = vadd.f32 %v267, %v271
    %v278 = vadd.f32 %v268, %v272
    %v279 = vadd.f32 %v269, %v273
    %v283 = vrot.slane %v278, 6
    %v284 = vrot.slane %v279, 4
    %v285 = vsel %vm198, %v277, %v283
    %vm286 = vcmask 1043456
    %v287 = vsel %vm286, %v285, %v284
    %289 = vst [vmem:[#allocation8] sm:$0x3f] %v287
    // Predicated region
    $region22: #{tpu_custom_call.1} parent=1 // pred_check
      _
    $region23: #{tpu_custom_call.1} parent=1 // pred_check_branch
      %291 = sbr.rel (0) target = $region25
    $region24: #{tpu_custom_call.1} parent=1 // pred_region
      %293 = vsyncadd [#allocation5], 0
      %s295 = sshll.u32 [#allocation8], 4
      %s296 = int_to_ptr.vmem [resolvable:$true] %s295
      %s297 = sshll.u32 %s3, 4
      %s298 = int_to_ptr.hbm [resolvable:$true] %s297
      %300 = dma.vmem_to_hbm [thread:$0]  %s296, 96, %s298, [#allocation5]
    $region25: #{tpu_custom_call.1} parent=1 // pred_fallthru
      _
    // Predicated region
    $region26: #{tpu_custom_call.1} parent=1 // pred_check
      _
    $region27: #{tpu_custom_call.1} parent=1 // pred_check_branch
      %302 = sbr.rel (0) target = $region29
    $region28: #{tpu_custom_call.1} parent=1 // pred_region
      %304 = dma.done [#allocation5], 96
    $region29: #{tpu_custom_call.1} parent=1 // pred_fallthru
      _
    %305 = vsyncpa [#allocation4], 1
    %306 = vsyncpa [#allocation7], 1
    %307 = vsyncpa [#allocation5], 1

</llo_original>
